<compile_context>
chip_gen: v7x
topology: tpu7x:2x2x1
jax: 0.10.0
libtpu: 0.0.40
codegen_flags: <defaults>
</compile_context>

<pallas_src>
import functools

import jax
import jax.numpy as jnp
from jax.experimental import pallas as pl
from jax.experimental.pallas import tpu as pltpu


NEG_SLOPE = 0.01  # torch.nn.LeakyReLU default negative_slope


def _conv_mm_kernel(xc_ref, w_ref, b_ref, o_ref):
    """One (C, TM) output block: leaky_relu(w_col @ x_col + bias)."""
    # (C, K) @ (K, TM) -> (C, TM), accumulated in f32 on the MXU.
    acc = jnp.dot(w_ref[...], xc_ref[...], preferred_element_type=jnp.float32)
    acc = acc + b_ref[...]                       # (C, TM) + (C, 1) broadcast
    o_ref[...] = jnp.where(acc > 0, acc, NEG_SLOPE * acc).astype(o_ref.dtype)


def _round_up(x, m):
    return ((x + m - 1) // m) * m


@functools.partial(jax.jit, static_argnames=("compute_dtype",))
def downsampling_forward(x, weight, bias, *, compute_dtype=jnp.bfloat16):
    """x: (N, C, H, W); weight: (C, C, 3, 3); bias: (C,) -> (N, C, Ho, Wo)."""
    N, C, H, W = x.shape
    Ho = (H + 2 - 3) // 2 + 1
    Wo = (W + 2 - 3) // 2 + 1
    K = 9 * C
    M1 = Ho * Wo  # per-sample output spatial size

    # ---- build the tap matrix directly in (N, K, M) layout, spatial last ----
    # (single fused XLA pass: pad + strided gather + concat + bf16 convert)
    x_pad = jnp.pad(x, ((0, 0), (0, 0), (1, 1), (1, 1)))
    taps = [
        x_pad[:, :, kh:kh + 2 * Ho - 1:2, kw:kw + 2 * Wo - 1:2]  # (N, C, Ho, Wo)
        for kh in range(3)
        for kw in range(3)
    ]
    xc = jnp.stack(taps, axis=1).reshape(N, K, M1).astype(compute_dtype)

    # weight (Cout, Cin, 3, 3) -> (Cout, K) with K ordered as (tap, Cin),
    # matching xc's K ordering.
    w_col = jnp.transpose(weight, (0, 2, 3, 1)).reshape(C, K).astype(compute_dtype)
    b_col = bias.astype(jnp.float32).reshape(C, 1)

    # ---- pick the lane tile TM against a conservative VMEM budget -----------
    in_bytes = jnp.dtype(compute_dtype).itemsize
    out_bytes = jnp.dtype(x.dtype).itemsize
    budget = 32 * 1024 * 1024                       # stays under v7x's 64 MiB VMEM
    w_vmem = 2 * C * K * in_bytes                   # resident weight (2 bufs)
    per_col = 2 * K * in_bytes + 2 * C * out_bytes  # x_col + out per lane column
    tm_cap = max(128, (budget - w_vmem) // per_col // 128 * 128)
    TM = int(min(1024, tm_cap))
    if M1 <= TM:
        TM, Mp = M1, M1                 # single full-width block per sample
    else:
        Mp = _round_up(M1, TM)
        if Mp != M1:
            xc = jnp.pad(xc, ((0, 0), (0, 0), (0, Mp - M1)))

    grid = (N, Mp // TM)

    out = pl.pallas_call(
        _conv_mm_kernel,
        out_shape=jax.ShapeDtypeStruct((N, C, Mp), x.dtype),
        grid_spec=pltpu.PrefetchScalarGridSpec(
            num_scalar_prefetch=0,
            grid=grid,
            in_specs=[
                pl.BlockSpec((None, K, TM), lambda n, m: (n, 0, m)),  # x_col tile
                pl.BlockSpec((C, K), lambda n, m: (0, 0)),            # weights (constant)
                pl.BlockSpec((C, 1), lambda n, m: (0, 0)),            # bias column
            ],
            out_specs=pl.BlockSpec((None, C, TM), lambda n, m: (n, 0, m)),
        ),
        compiler_params=pltpu.CompilerParams(
            dimension_semantics=("parallel", "parallel"),
            vmem_limit_bytes=48 * 1024 * 1024,
        ),
    )(xc, w_col, b_col)

    if Mp != M1:
        out = out[:, :, :M1]            # drop garbage lanes from M padding
    return out.reshape(N, C, Ho, Wo)    # already channel-major: no transpose


if __name__ == "__main__":
    key = jax.random.PRNGKey(0)
    kx, kw, kb = jax.random.split(key, 3)

    N, C, H, W = 2, 4, 16, 16
    x = jax.random.normal(kx, (N, C, H, W), dtype=jnp.float32)

    # deterministic param init (kaiming-ish scale for a 3x3 conv)
    fan_in = C * 3 * 3
    weight = jax.random.normal(kw, (C, C, 3, 3), dtype=jnp.float32) * (1.0 / fan_in) ** 0.5
    bias = jax.random.normal(kb, (C,), dtype=jnp.float32) * 0.01

    y = downsampling_forward(x, weight, bias)
    jax.block_until_ready(y)

    # Reference: XLA conv on the same bf16-rounded operands (the kernel feeds
    # the MXU bf16 by design), f32 accumulation, + bias + LeakyReLU.
    xb = x.astype(jnp.bfloat16).astype(jnp.float32)
    wb = weight.astype(jnp.bfloat16).astype(jnp.float32)
    ref = jax.lax.conv_general_dilated(
        xb, wb, window_strides=(2, 2), padding=((1, 1), (1, 1)),
        dimension_numbers=("NCHW", "OIHW", "NCHW"),
        precision=jax.lax.Precision.HIGHEST,
    ) + bias.reshape(1, C, 1, 1)
    ref = jnp.where(ref > 0, ref, NEG_SLOPE * ref)

    assert y.shape == (N, C, H // 2, W // 2), y.shape
    max_err = float(jnp.max(jnp.abs(y - ref)))
    assert max_err < 5e-3, max_err
    print("KERNEL_OK")
</pallas_src>

<mosaic_0001>
module attributes {stable_mosaic.version = 11 : i64} {
  func.func @_conv_mm_kernel(%arg0: i32, %arg1: i32, %arg2: memref<1x36x64xbf16, #tpu.memory_space<vmem>>, %arg3: memref<4x36xbf16, #tpu.memory_space<vmem>>, %arg4: memref<4x1xf32, #tpu.memory_space<vmem>>, %arg5: memref<1x4x64xf32, #tpu.memory_space<vmem>>) attributes {dimension_semantics = [#tpu.dimension_semantics<parallel>, #tpu.dimension_semantics<parallel>], iteration_bounds = array<i64: 2, 1>, scalar_prefetch = 0 : i64, scratch_operands = 0 : i64, tpu.core_type = #tpu.core_type<tc>, window_params = [{transform_indices = @transform_0, window_bounds = array<i64: 1, 36, 64>}, {pipeline_mode = #tpu.pipeline_mode<synchronous>, transform_indices = @transform_1, window_bounds = array<i64: 4, 36>}, {pipeline_mode = #tpu.pipeline_mode<synchronous>, transform_indices = @transform_2, window_bounds = array<i64: 4, 1>}, {transform_indices = @transform_3, window_bounds = array<i64: 1, 4, 64>}]} {
    %c0 = arith.constant 0 : index
    %c0_0 = arith.constant 0 : index
    %0 = vector.load %arg3[%c0, %c0_0] : memref<4x36xbf16, #tpu.memory_space<vmem>>, vector<4x36xbf16>
    %c0_1 = arith.constant 0 : index
    %c0_2 = arith.constant 0 : index
    %c0_3 = arith.constant 0 : index
    %1 = vector.load %arg2[%c0_1, %c0_2, %c0_3] : memref<1x36x64xbf16, #tpu.memory_space<vmem>>, vector<1x36x64xbf16>
    %2 = vector.shape_cast %1 : vector<1x36x64xbf16> to vector<36x64xbf16>
    %cst = arith.constant dense<0.000000e+00> : vector<4x64xf32>
    %3 = tpu.matmul %0, %2, %cst {dimension_numbers = #tpu.dot_dimension_numbers<[1], [0], [0], [1], [0, 0, 1, 1], [], []>} : vector<4x36xbf16>, vector<36x64xbf16>, vector<4x64xf32> -> vector<4x64xf32>
    %c0_4 = arith.constant 0 : index
    %c0_5 = arith.constant 0 : index
    %4 = vector.load %arg4[%c0_4, %c0_5] : memref<4x1xf32, #tpu.memory_space<vmem>>, vector<4x1xf32>
    %5 = vector.broadcast %4 : vector<4x1xf32> to vector<4x64xf32>
    %6 = arith.addf %3, %5 : vector<4x64xf32>
    %cst_6 = arith.constant 0.000000e+00 : f32
    %7 = vector.broadcast %cst_6 : f32 to vector<4x64xf32>
    %8 = arith.cmpf ogt, %6, %7 : vector<4x64xf32>
    %cst_7 = arith.constant 0.00999999977 : f32
    %9 = vector.broadcast %cst_7 : f32 to vector<4x64xf32>
    %10 = arith.mulf %9, %6 : vector<4x64xf32>
    %11 = arith.select %8, %6, %10 : vector<4x64xi1>, vector<4x64xf32>
    %c0_8 = arith.constant 0 : index
    %c0_9 = arith.constant 0 : index
    %c0_10 = arith.constant 0 : index
    %12 = vector.load %arg5[%c0_8, %c0_9, %c0_10] : memref<1x4x64xf32, #tpu.memory_space<vmem>>, vector<1x4x64xf32>
    %13 = vector.shape_cast %12 : vector<1x4x64xf32> to vector<4x64xf32>
    %14 = vector.shape_cast %11 : vector<4x64xf32> to vector<1x4x64xf32>
    tpu.vector_store %arg5[%c0_8, %c0_9, %c0_10], %14 {strides = array<i32>} : memref<1x4x64xf32, #tpu.memory_space<vmem>>, vector<1x4x64xf32>,
    return
  }
  func.func @transform_0(%arg0: i32, %arg1: i32) -> (i32, i32, i32) {
    %c0_i32 = arith.constant 0 : i32
    %c0_i32_0 = arith.constant 0 : i32
    return %arg0, %c0_i32, %arg1 : i32, i32, i32
  }
  func.func @transform_1(%arg0: i32, %arg1: i32) -> (i32, i32) {
    %c0_i32 = arith.constant 0 : i32
    %c0_i32_0 = arith.constant 0 : i32
    %c0_i32_1 = arith.constant 0 : i32
    return %c0_i32, %c0_i32_0 : i32, i32
  }
  func.func @transform_2(%arg0: i32, %arg1: i32) -> (i32, i32) {
    %c0_i32 = arith.constant 0 : i32
    %c0_i32_0 = arith.constant 0 : i32
    %c0_i32_1 = arith.constant 0 : i32
    return %c0_i32, %c0_i32_0 : i32, i32
  }
  func.func @transform_3(%arg0: i32, %arg1: i32) -> (i32, i32, i32) {
    %c0_i32 = arith.constant 0 : i32
    %c0_i32_0 = arith.constant 0 : i32
    return %arg0, %c0_i32, %arg1 : i32, i32, i32
  }
}

</mosaic_0001>

<llo_original>
// kernel: downsampling_forward.1
$region0: #{downsampling_forward.1}
  #allocation0 [shape = 'u32[]', space=smem, size = 0x4, offset = 0x4, fixed_abs, tag = 'smem constant byte address 0x4 - core index']
  #allocation1 [shape = 'u32[144,128]{1,0:T(1,128)}', space=vmem, size = 0x12000, scoped, tag = 'internal scratch']
  %s0 = inlined_call_operand.vmem [shape: bf16[2,36,64], index: 0, kind: input, shape index: {}]
  %s1 = inlined_call_operand.vmem [shape: bf16[4,36], index: 1, kind: input, shape index: {}]
  %s2 = inlined_call_operand.vmem [shape: f32[4,1], index: 2, kind: input, shape index: {}]
  %s3 = inlined_call_operand.vmem [shape: f32[2,4,64], index: 3, kind: output, shape index: {}]
  %s4 = sld [smem:[#allocation0]]
  $region45: #{downsampling_forward.1} parent=0
    _
  %s6 = ssub.s32 1, %s4
  %s7 = scalar_select 0, %s6, %s4
  loop: start=0, step=1, limit=4
  $region2: #{downsampling_forward.1} parent=0 // loop_pre_header
    _
  $region3: #{downsampling_forward.1} parent=0 // loop_header
    %s9 = sphi 0, %s13
    %p10 = scmp.ge.s32.totalorder %s9, 4
    %s16 = sphi 0, %s28
    %s17 = sphi 0, %s24
    %s18 = sphi 0, %s16
    %s19 = sphi 0, %s17
    %s20 = sphi 0, %s18
    %s21 = sphi 0, %s19
    %s33 = sphi 0, %s35
    %s36 = sphi 0, %s33
    %s37 = sphi 0, %s36
    %s53 = sphi 0, %s37
    %s57 = sphi 0, %s57
    %s59 = sphi 0, %s57
    %s60 = sphi 0, %s59
    %s74 = sphi 0, %s60
    %s78 = sphi 0, %s78
    %s80 = sphi 0, %s78
    %s81 = sphi 0, %s80
    %s95 = sphi 0, %s81
    %s103 = sphi 0, %s105
    %s106 = sphi 0, %s103
    %s107 = sphi 0, %s106
    %s123 = sphi 0, %s107
  $region4: #{downsampling_forward.1} parent=0 // loop_header_branch
    %12 = sbr.rel (%p10) target = $region8
  $region5: #{downsampling_forward.1} parent=0 // loop_body
    %s14 = ssub.s32 %s9, 1
    %s15 = ssub.s32 %s9, 2
    %s22 = sadd.s32 1, %s17
    %p23 = scmp.ge.s32.totalorder %s22, 1
    %s24 = scalar_select %p23, 0, %s22
    %s25 = sadd.s32 1, %s16
    %s26 = scalar_select %p23, %s25, %s16
    %p27 = scmp.ge.s32.totalorder %s26, 2
    %s28 = scalar_select %p27, 0, %s26
    %s29 = ssub.s32 %s16, %s28
    %s30 = ssub.s32 %s17, %s24
    %s31 = sor.u32 %s29, %s30
    %p32 = scmp.eq.s32.totalorder %s31, 0
    %s34 = sadd.s32 %s33, 1
    %s35 = scalar_select %p32, %s33, %s34
    %p38 = pneg %p32
    %p39 = scmp.eq.s32.totalorder %s9, 1
    %p40 = por %p38, %p39
    %p41 = scmp.ne.s32.totalorder %s33, %s36
    %p42 = scmp.eq.s32.totalorder %s9, 0
    %p43 = por %p41, %p42
    %p44 = scmp.ne.s32.totalorder %s33, %s36
    %p45 = scmp.eq.s32.totalorder %s14, 1
    %p46 = por %p44, %p45
    %p47 = scmp.ne.s32.totalorder %s36, %s37
    %p48 = scmp.eq.s32.totalorder %s14, 0
    %p49 = por %p47, %p48
    %p50 = scmp.ne.s32.totalorder %s36, %s37
    %p51 = scmp.eq.s32.totalorder %s15, 1
    %p52 = por %p50, %p51
    %p54 = scmp.ne.s32.totalorder %s37, %s53
    %p55 = scmp.eq.s32.totalorder %s15, 0
    %p56 = por %p54, %p55
    %s58 = sadd.s32 %s57, 1
    %p61 = scmp.eq.s32.totalorder %s9, 1
    %p62 = scmp.ne.s32.totalorder %s57, %s59
    %p63 = scmp.eq.s32.totalorder %s9, 0
    %p64 = por %p62, %p63
    %p65 = scmp.ne.s32.totalorder %s57, %s59
    %p66 = scmp.eq.s32.totalorder %s14, 1
    %p67 = por %p65, %p66
    %p68 = scmp.ne.s32.totalorder %s59, %s60
    %p69 = scmp.eq.s32.totalorder %s14, 0
    %p70 = por %p68, %p69
    %p71 = scmp.ne.s32.totalorder %s59, %s60
    %p72 = scmp.eq.s32.totalorder %s15, 1
    %p73 = por %p71, %p72
    %p75 = scmp.ne.s32.totalorder %s60, %s74
    %p76 = scmp.eq.s32.totalorder %s15, 0
    %p77 = por %p75, %p76
    %s79 = sadd.s32 %s78, 1
    %p82 = scmp.eq.s32.totalorder %s9, 1
    %p83 = scmp.ne.s32.totalorder %s78, %s80
    %p84 = scmp.eq.s32.totalorder %s9, 0
    %p85 = por %p83, %p84
    %p86 = scmp.ne.s32.totalorder %s78, %s80
    %p87 = scmp.eq.s32.totalorder %s14, 1
    %p88 = por %p86, %p87
    %p89 = scmp.ne.s32.totalorder %s80, %s81
    %p90 = scmp.eq.s32.totalorder %s14, 0
    %p91 = por %p89, %p90
    %p92 = scmp.ne.s32.totalorder %s80, %s81
    %p93 = scmp.eq.s32.totalorder %s15, 1
    %p94 = por %p92, %p93
    %p96 = scmp.ne.s32.totalorder %s81, %s95
    %p97 = scmp.eq.s32.totalorder %s15, 0
    %p98 = por %p96, %p97
    %s99 = ssub.s32 %s16, %s28
    %s100 = ssub.s32 %s17, %s24
    %s101 = sor.u32 %s99, %s100
    %p102 = scmp.eq.s32.totalorder %s101, 0
    %s104 = sadd.s32 %s103, 1
    %s105 = scalar_select %p102, %s103, %s104
    %p108 = pneg %p102
    %p109 = scmp.eq.s32.totalorder %s9, 1
    %p110 = por %p108, %p109
    %p111 = scmp.ne.s32.totalorder %s103, %s106
    %p112 = scmp.eq.s32.totalorder %s9, 0
    %p113 = por %p111, %p112
    %p114 = scmp.ne.s32.totalorder %s103, %s106
    %p115 = scmp.eq.s32.totalorder %s14, 1
    %p116 = por %p114, %p115
    %p117 = scmp.ne.s32.totalorder %s106, %s107
    %p118 = scmp.eq.s32.totalorder %s14, 0
    %p119 = por %p117, %p118
    %p120 = scmp.ne.s32.totalorder %s106, %s107
    %p121 = scmp.eq.s32.totalorder %s15, 1
    %p122 = por %p120, %p121
    %p124 = scmp.ne.s32.totalorder %s107, %s123
    %p125 = scmp.eq.s32.totalorder %s15, 0
    %p126 = por %p124, %p125
    %p127 = scmp.le.s32.totalorder 1, %s9
    %p128 = scmp.lt.s32.totalorder %s9, 3
    %p129 = pnand %p127, %p128
    %p130 = pneg %p129
    // Predicated region
    $region9: #{downsampling_forward.1} parent=5 // pred_check
      _
    $region10: #{downsampling_forward.1} parent=5 // pred_check_branch
      %132 = sbr.rel (%p129) target = $region12
    $region11: #{downsampling_forward.1} parent=5 // pred_region
      %s133 = ssub.s32 %s9, 1
      // Predicated region
      $region13: #{downsampling_forward.1} parent=11 // pred_check
        %p134 = pneg %p70
      $region14: #{downsampling_forward.1} parent=11 // pred_check_branch
        %136 = sbr.rel (%p134) target = $region16
      $region15: #{downsampling_forward.1} parent=11 // pred_region
        _
      $region16: #{downsampling_forward.1} parent=11 // pred_fallthru
        _
      // Predicated region
      $region17: #{downsampling_forward.1} parent=11 // pred_check
        %p137 = pneg %p91
      $region18: #{downsampling_forward.1} parent=11 // pred_check_branch
        %139 = sbr.rel (%p137) target = $region20
      $region19: #{downsampling_forward.1} parent=11 // pred_region
        _
      $region20: #{downsampling_forward.1} parent=11 // pred_fallthru
        _
    $region12: #{downsampling_forward.1} parent=5 // pred_fallthru
      _
    %p140 = scmp.lt.s32.totalorder %s9, 2
    // Predicated region
    $region21: #{downsampling_forward.1} parent=5 // pred_check
      %p141 = pneg %p140
    $region22: #{downsampling_forward.1} parent=5 // pred_check_branch
      %143 = sbr.rel (%p141) target = $region24
    $region23: #{downsampling_forward.1} parent=5 // pred_region
      // Predicated region
      $region25: #{downsampling_forward.1} parent=23 // pred_check
        %p144 = pneg %p43
      $region26: #{downsampling_forward.1} parent=23 // pred_check_branch
        %146 = sbr.rel (%p144) target = $region28
      $region27: #{downsampling_forward.1} parent=23 // pred_region
        %p147 = scmp.lt.s32.totalorder %s16, 1
        %s148 = scalar_select %p147, %s16, 1
        %p149 = scmp.lt.s32.totalorder %s17, 0
        %s150 = scalar_select %p149, %s17, 0
        %s151 = smul.addr %s148, 5
        %s152 = sadd.s32 %s150, %s151
        %s153 = smul.addr %s152, 4
        %s154 = scalar_lea.vmem %s0, %s153
      $region28: #{downsampling_forward.1} parent=23 // pred_fallthru
        _
    $region24: #{downsampling_forward.1} parent=5 // pred_fallthru
      _
    %p155 = scmp.le.s32.totalorder 1, %s9
    %p156 = scmp.lt.s32.totalorder %s9, 3
    %p157 = pnand %p155, %p156
    %p158 = pneg %p157
    // Predicated region
    $region29: #{downsampling_forward.1} parent=5 // pred_check
      _
    $region30: #{downsampling_forward.1} parent=5 // pred_check_branch
      %160 = sbr.rel (%p157) target = $region32
    $region31: #{downsampling_forward.1} parent=5 // pred_region
      %s161 = ssub.s32 %s9, 1
      %p162 = scmp.lt.s32.totalorder %s18, 1
      %s163 = scalar_select %p162, %s18, 1
      %p164 = scmp.lt.s32.totalorder %s19, 0
      %s165 = scalar_select %p164, %s19, 0
      %s166 = smul.addr %s163, 5
      %s167 = sadd.s32 %s165, %s166
      %s168 = smul.addr %s167, 4
      %s169 = scalar_lea.vmem %s0, %s168
      %p170 = pneg %p49
      %p171 = pneg %p46
      %p172 = pneg %p70
      %p173 = pneg %p67
      %p174 = pneg %p91
      %p175 = pneg %p88
      %p176 = pneg %p119
      %p177 = pneg %p116
      %p178 = scmp.lt.s32.totalorder %s18, 1
      %s179 = scalar_select %p178, %s18, 1
      %p180 = scmp.lt.s32.totalorder %s19, 0
      %s181 = scalar_select %p180, %s19, 0
      %s182 = sadd.s32 %s181, %s179
      %s183 = smul.addr %s182, 4
      %s184 = scalar_lea.vmem %s3, %s183
      %p185 = scmp.lt.s32.totalorder %s18, 1
      %s186 = scalar_select %p185, %s18, 1
      %p187 = scmp.lt.s32.totalorder %s19, 0
      %s188 = scalar_select %p187, %s19, 0
      %s189 = smul.addr %s186, 5
      %s190 = sadd.s32 %s188, %s189
      %s191 = smul.addr %s190, 4
      %s192 = scalar_lea.vmem %s0, %s191
      %p193 = scmp.lt.s32.totalorder %s18, 1
      %s194 = scalar_select %p193, %s18, 1
      %p195 = scmp.lt.s32.totalorder %s19, 0
      %s196 = scalar_select %p195, %s19, 0
      %s197 = sadd.s32 %s196, %s194
      %s198 = smul.addr %s197, 4
      %s199 = scalar_lea.vmem %s3, %s198
      %v201 = vld [vmem:[%s1] sm:$0x3]
      %v202 = vld [vmem:[%s192] sm:$0xf]
      %v203 = vld [vmem:[%s192 + $0x4] sm:$0xf]
      %v204 = vld [vmem:[%s192 + $0x8] sm:$0xf]
      %v205 = vld [vmem:[%s192 + $0xc] sm:$0xf]
      %v206 = vld [vmem:[%s192 + $0x10] sm:$0x3]
      %v207 = vld [vmem:[%s2] sm:$0xf]
      %209 = vset.pattern.permute.xlu0 0
      %210 = vperm.xlu0 %209, %v207
      %v211 = vpop.permute.xlu0 %210
      %v218 = vunpack.c.l.b16 %v202
      %v219 = vunpack.c.l.b16 %v203
      %v220 = vunpack.c.l.b16 %v204
      %v221 = vunpack.c.l.b16 %v205
      %v222 = vunpack.c.l.b16 %v206
      %v223 = vpack.c.b16 %v219, %v218
      %v224 = vpack.c.b16 %v221, %v220
      %v225 = vpack.c.b16 %v222, %v222
      %vm228 = vcmask 293888
      %v230 = vsel %vm228, %v201, 0
      %vm232 = vcmask 1041408
      %v234 = vsel %vm232, %v225, 0
      %236 = vmatprep.subr.bf16.mxu0 0
      %237 = vmatpush1.bf16.msra.mxu0 %v223
      %238 = vmatprep.subr.bf16.mxu0 0
      %239 = vmatpush1.bf16.msra.mxu0 %v224
      %240 = vmatprep.subr.bf16.mxu0 0
      %241 = vmatpush1.bf16.msra.mxu0 %v234
      %242 = vmatprep.subr.bf16.mxu0 0
      %243 = vmatpush1.bf16.msra.mxu0 0
      %244 = vmatprep.subr.bf16.mxu0 0
      %245 = vmatpush1.bf16.msra.mxu0 0
      %246 = vmatprep.subr.bf16.mxu0 0
      %247 = vmatpush1.bf16.msra.mxu0 0
      %248 = vmatprep.subr.bf16.mxu0 0
      %249 = vmatpush1.bf16.msra.mxu0 0
      %250 = vmatprep.subr.bf16.mxu0 0
      %251 = vmatpush1.bf16.msra.mxu0 0
      %252 = vmatprep.subr.bf16.mxu0 0
      %253 = vmatpush1.bf16.msra.mxu0 0
      %254 = vmatprep.subr.bf16.mxu0 0
      %255 = vmatpush1.bf16.msra.mxu0 0
      %256 = vmatprep.subr.bf16.mxu0 0
      %257 = vmatpush1.bf16.msra.mxu0 0
      %258 = vmatprep.subr.bf16.mxu0 0
      %259 = vmatpush1.bf16.msra.mxu0 0
      %260 = vmatprep.subr.bf16.mxu0 0
      %261 = vmatpush1.bf16.msra.mxu0 0
      %262 = vmatprep.subr.bf16.mxu0 0
      %263 = vmatpush1.bf16.msra.mxu0 0
      %264 = vmatprep.subr.bf16.mxu0 0
      %265 = vmatpush1.bf16.msra.mxu0 0
      %266 = vmatprep.subr.bf16.mxu0 0
      %267 = vmatpush1.bf16.msra.mxu0 0
      %268 = vmatprep.mubr.bf16.mxu0 0
      %269 = vmatmul.mubr.bf16.gmra.mrb[0].mxu0 %v230
      %v270 = vpop.f32.mrb[0].mxu0
      %v271 = vadd.f32 %v211, %v270
      %v272 = vpop.f32.mrb[0].mxu0
      %v273 = vpop.f32.mrb[0].mxu0
      %v274 = vpop.f32.mrb[0].mxu0
      %275 = vdwg.mxu0
      %vm276 = vcmp.gt.f32.partialorder %v271, 0.0
      %v277 = vmul.f32 %v271, 0.01
      %v278 = vsel %vm276, %v271, %v277
      %vm279 = vcmask 519168
      %280 = vst.msk [vmem:[%s199] sm:$0xf] %vm279, %v278
      %p281 = scmp.lt.s32.totalorder %s18, 1
      %s282 = scalar_select %p281, %s18, 1
      %p283 = scmp.lt.s32.totalorder %s19, 0
      %s284 = scalar_select %p283, %s19, 0
      %s285 = sadd.s32 %s284, %s282
      %s286 = smul.addr %s285, 4
      %s287 = scalar_lea.vmem %s3, %s286
      // Predicated region
      $region33: #{downsampling_forward.1} parent=31 // pred_check
        %p288 = pneg %p116
      $region34: #{downsampling_forward.1} parent=31 // pred_check_branch
        %290 = sbr.rel (%p288) target = $region36
      $region35: #{downsampling_forward.1} parent=31 // pred_region
        _
      $region36: #{downsampling_forward.1} parent=31 // pred_fallthru
        _
    $region32: #{downsampling_forward.1} parent=5 // pred_fallthru
      _
    %p291 = scmp.le.s32.totalorder 2, %s9
    // Predicated region
    $region37: #{downsampling_forward.1} parent=5 // pred_check
      %p292 = pneg %p291
    $region38: #{downsampling_forward.1} parent=5 // pred_check_branch
      %294 = sbr.rel (%p292) target = $region40
    $region39: #{downsampling_forward.1} parent=5 // pred_region
      %s295 = ssub.s32 %s9, 2
      // Predicated region
      $region41: #{downsampling_forward.1} parent=39 // pred_check
        %p296 = pneg %p122
      $region42: #{downsampling_forward.1} parent=39 // pred_check_branch
        %298 = sbr.rel (%p296) target = $region44
      $region43: #{downsampling_forward.1} parent=39 // pred_region
        %p299 = scmp.lt.s32.totalorder %s20, 1
        %s300 = scalar_select %p299, %s20, 1
        %p301 = scmp.lt.s32.totalorder %s21, 0
        %s302 = scalar_select %p301, %s21, 0
        %s303 = sadd.s32 %s302, %s300
        %s304 = smul.addr %s303, 4
        %s305 = scalar_lea.vmem %s3, %s304
      $region44: #{downsampling_forward.1} parent=39 // pred_fallthru
        _
    $region40: #{downsampling_forward.1} parent=5 // pred_fallthru
      _
  $region6: #{downsampling_forward.1} parent=0 // loop_footer
    %s13 = sadd.s32 1, %s9
  $region7: #{downsampling_forward.1} parent=0 // loop_footer_branch
    %8 = sbr.rel target = $region3
  $region8: #{downsampling_forward.1} parent=0 // loop_exit
    _

</llo_original>
